<compile_context>
chip_gen: v5e
topology: v5e:2x2
jax: 0.10.0
libtpu: 0.0.40
codegen_flags: <defaults>
</compile_context>

<pallas_src>
import math
from functools import partial

import jax
import jax.numpy as jnp
from jax.experimental import pallas as pl
from jax.experimental.pallas import tpu as pltpu


def _conv1d_k3_kernel(w_ref, x_ref, o_ref, *, period):
    # w_ref: SMEM (3,) conv taps.
    # x_ref/o_ref: VMEM tile (TN, W) where W = g*period packs g logical rows of
    # length `period` along the lane axis.
    x = x_ref[...].astype(jnp.float32)                                # (TN, W)
    width = x.shape[-1]

    lane = jax.lax.broadcasted_iota(jnp.int32, x.shape, dimension=1)  # 2-D iota (TPU-legal)
    pos = lane % period                                               # position within logical row

    # x[l-1]: rotate right by 1 (XLU), kill the tap that wrapped across a row boundary.
    x_prev = jnp.where(pos == 0, 0.0, pltpu.roll(x, shift=1, axis=1))
    # x[l+1]: rotate left by 1 (== rotate right by W-1), kill the wrapped tap.
    x_next = jnp.where(pos == period - 1, 0.0, pltpu.roll(x, shift=width - 1, axis=1))

    y = w_ref[0] * x_prev + w_ref[1] * x + w_ref[2] * x_next
    o_ref[...] = y.astype(o_ref.dtype)


def conv1d_k3_p1(x, weight):
    """x: (N, 1, L), weight: (1, 1, 3)  ->  (N, 1, L).  Conv1d(k=3, pad=1, no bias)."""
    n, c, l = x.shape
    assert c == 1 and weight.shape == (1, 1, 3)

    w_smem = weight.reshape(3).astype(jnp.float32)
    x2d = x.reshape(n, l)
    itemsize = x.dtype.itemsize

    # ---- Lane-dense packing: pack g logical rows per packed row so width % 128 == 0.
    g = 1 if l % 128 == 0 else 128 // math.gcd(l, 128)
    n_pad = pl.cdiv(n, g) * g
    if n_pad != n:
        x2d = jnp.pad(x2d, ((0, n_pad - n), (0, 0)))
    rows = n_pad // g
    width = g * l                       # always a multiple of 128
    x_packed = x2d.reshape(rows, width)
    row_bytes = width * itemsize

    # ---- Generation-aware tile / VMEM budgeting.
    try:
        vmem_cap = int(pltpu.get_tpu_info().vmem_capacity_bytes)
    except Exception:  # pragma: no cover - interpret mode / older runtimes
        vmem_cap = 64 * 1024 * 1024     # conservative: v7x per-TC VMEM
    vmem_budget = vmem_cap - 16 * 1024 * 1024
    # Peak ~7x block bytes: 2x(in)+2x(out) pipeline buffers + ~3 f32 temporaries.
    target_tile_bytes = max(1 << 20, min(16 * 1024 * 1024, vmem_budget // 7))

    rows_per_tile = max(1, target_tile_bytes // row_bytes)
    if rows <= 8 or rows_per_tile >= rows:
        tn = rows                                        # single block (full extent)
    else:
        tn = max(8, (min(rows_per_tile, rows) // 8) * 8)
    # Ensure >=2 grid steps when there is enough work so both v7x TensorCores stream.
    if rows >= 16 and pl.cdiv(rows, tn) < 2:
        tn = max(8, ((rows // 2) // 8) * 8)
    tn = min(tn, rows)
    if tn != rows and tn % 8 != 0:                       # keep blocks (8,128)-legal
        tn = max(8, (tn // 8) * 8)
    grid = (pl.cdiv(rows, tn),)

    block_io_bytes = tn * row_bytes
    block_f32_bytes = tn * width * 4
    vmem_limit = 4 * block_io_bytes + 3 * block_f32_bytes + 4 * 1024 * 1024
    vmem_limit = int(max(16 * 1024 * 1024, min(vmem_limit, vmem_cap - 12 * 1024 * 1024)))

    kernel = partial(_conv1d_k3_kernel, period=l)

    out_packed = pl.pallas_call(
        kernel,
        out_shape=jax.ShapeDtypeStruct((rows, width), x.dtype),
        grid=grid,
        in_specs=[
            pl.BlockSpec(memory_space=pltpu.MemorySpace.SMEM),   # conv taps (3,)
            pl.BlockSpec((tn, width), lambda i: (i, 0)),         # lane-dense slab tile
        ],
        out_specs=pl.BlockSpec((tn, width), lambda i: (i, 0)),
        compiler_params=pltpu.CompilerParams(
            dimension_semantics=("parallel",),
            vmem_limit_bytes=vmem_limit,
        ),
        cost_estimate=pl.CostEstimate(
            flops=5 * rows * width,                               # 3 mul + 2 add / output
            transcendentals=0,
            bytes_accessed=2 * rows * width * itemsize,
        ),
    )(w_smem, x_packed)

    out2d = out_packed.reshape(n_pad, l)[:n]
    return out2d.reshape(n, 1, l)


def _reference(x, weight):
    """Plain-JAX k=3 / pad=1 cross-correlation on the squeezed slab."""
    w = weight.reshape(3)
    x2 = x[:, 0, :]
    zc = jnp.zeros_like(x2[:, :1])
    x_prev = jnp.concatenate([zc, x2[:, :-1]], axis=1)
    x_next = jnp.concatenate([x2[:, 1:], zc], axis=1)
    return (w[0] * x_prev + w[1] * x2 + w[2] * x_next)[:, None, :]


if __name__ == "__main__":
    key = jax.random.PRNGKey(0)

    # Deterministic parameter init mirroring the PyTorch module:
    # self.conv.weight = ones(1, 1, 3) * 2.0
    weight = jnp.full((1, 1, 3), 2.0, dtype=jnp.float32)

    # Case 1: the module's small demo shape (N=2, C=1, L=16) -> packed (1, 128) slab.
    N, C, L = 2, 1, 16
    k1, k2 = jax.random.split(key)
    x = jax.random.normal(k1, (N, C, L), dtype=jnp.float32)
    out = jax.block_until_ready(conv1d_k3_p1(x, weight))
    assert out.shape == (N, C, L)
    assert jnp.allclose(out, _reference(x, weight), atol=1e-5), "mismatch (packed path)"

    # Case 2: L already lane-dense (multiple of 128), multi-block grid with a ragged tail.
    N2, L2 = 20, 128
    x2 = jax.random.normal(k2, (N2, 1, L2), dtype=jnp.float32)
    out2 = jax.block_until_ready(conv1d_k3_p1(x2, weight))
    assert out2.shape == (N2, 1, L2)
    assert jnp.allclose(out2, _reference(x2, weight), atol=1e-5), "mismatch (tiled path)"

    print("KERNEL_OK")
</pallas_src>

<mosaic_0001>
module attributes {stable_mosaic.version = 11 : i64} {
  func.func @_conv1d_k3_kernel(%arg0: i32, %arg1: memref<3xf32, #tpu.memory_space<smem>>, %arg2: memref<1x128xf32, #tpu.memory_space<vmem>>, %arg3: memref<1x128xf32, #tpu.memory_space<vmem>>) attributes {dimension_semantics = [#tpu.dimension_semantics<parallel>], iteration_bounds = array<i64: 1>, scalar_prefetch = 0 : i64, scratch_operands = 0 : i64, tpu.core_type = #tpu.core_type<tc>, window_params = [{transform_indices = @transform_0, window_bounds = array<i64: 3>}, {transform_indices = @transform_1, window_bounds = array<i64: 1, 128>}, {transform_indices = @transform_2, window_bounds = array<i64: 1, 128>}]} {
    %c0 = arith.constant 0 : index
    %c0_0 = arith.constant 0 : index
    %0 = vector.load %arg2[%c0, %c0_0] : memref<1x128xf32, #tpu.memory_space<vmem>>, vector<1x128xf32>
    %1 = tpu.iota {dimensions = array<i32: 1>} : vector<1x128xi32>
    %c16_i32 = arith.constant 16 : i32
    %c0_i32 = arith.constant 0 : i32
    %2 = arith.cmpi eq, %c16_i32, %c0_i32 : i32
    %c1_i32 = arith.constant 1 : i32
    %3 = arith.select %2, %c1_i32, %c16_i32 : i32
    %4 = vector.broadcast %3 : i32 to vector<1x128xi32>
    %5 = arith.remsi %1, %4 : vector<1x128xi32>
    %c0_i32_1 = arith.constant 0 : i32
    %6 = vector.broadcast %c0_i32_1 : i32 to vector<1x128xi32>
    %7 = arith.cmpi ne, %5, %6 : vector<1x128xi32>
    %c0_i32_2 = arith.constant 0 : i32
    %8 = vector.broadcast %c0_i32_2 : i32 to vector<1x128xi32>
    %9 = arith.cmpi slt, %5, %8 : vector<1x128xi32>
    %c0_i32_3 = arith.constant 0 : i32
    %10 = arith.cmpi slt, %3, %c0_i32_3 : i32
    %11 = vector.broadcast %10 : i1 to vector<1x128xi1>
    %12 = vector.broadcast %11 : vector<1x128xi1> to vector<1x128xi1>
    %13 = arith.xori %9, %12 : vector<1x128xi1>
    %14 = arith.andi %13, %7 : vector<1x128xi1>
    %15 = vector.broadcast %3 : i32 to vector<1x128xi32>
    %16 = arith.addi %5, %15 : vector<1x128xi32>
    %17 = arith.select %14, %16, %5 : vector<1x128xi1>, vector<1x128xi32>
    %c0_i32_4 = arith.constant 0 : i32
    %18 = vector.broadcast %c0_i32_4 : i32 to vector<1x128xi32>
    %19 = arith.cmpi eq, %17, %18 : vector<1x128xi32>
    %c1_i32_5 = arith.constant 1 : i32
    %20 = tpu.dynamic_rotate %0 by %c1_i32_5 dim 1 : vector<1x128xf32>, i32 -> vector<1x128xf32>
    %cst = arith.constant 0.000000e+00 : f32
    %21 = vector.broadcast %cst : f32 to vector<1x128xf32>
    %22 = arith.select %19, %21, %20 : vector<1x128xi1>, vector<1x128xf32>
    %c15_i32 = arith.constant 15 : i32
    %23 = vector.broadcast %c15_i32 : i32 to vector<1x128xi32>
    %24 = arith.cmpi eq, %17, %23 : vector<1x128xi32>
    %c127_i32 = arith.constant 127 : i32
    %25 = tpu.dynamic_rotate %0 by %c127_i32 dim 1 : vector<1x128xf32>, i32 -> vector<1x128xf32>
    %cst_6 = arith.constant 0.000000e+00 : f32
    %26 = vector.broadcast %cst_6 : f32 to vector<1x128xf32>
    %27 = arith.select %24, %26, %25 : vector<1x128xi1>, vector<1x128xf32>
    %c0_7 = arith.constant 0 : index
    %28 = memref.load %arg1[%c0_7] : memref<3xf32, #tpu.memory_space<smem>>
    %29 = vector.broadcast %28 : f32 to vector<1x128xf32>
    %30 = arith.mulf %29, %22 : vector<1x128xf32>
    %c1 = arith.constant 1 : index
    %31 = memref.load %arg1[%c1] : memref<3xf32, #tpu.memory_space<smem>>
    %32 = vector.broadcast %31 : f32 to vector<1x128xf32>
    %33 = arith.mulf %32, %0 : vector<1x128xf32>
    %34 = arith.addf %30, %33 : vector<1x128xf32>
    %c2 = arith.constant 2 : index
    %35 = memref.load %arg1[%c2] : memref<3xf32, #tpu.memory_space<smem>>
    %36 = vector.broadcast %35 : f32 to vector<1x128xf32>
    %37 = arith.mulf %36, %27 : vector<1x128xf32>
    %38 = arith.addf %34, %37 : vector<1x128xf32>
    %c0_8 = arith.constant 0 : index
    %c0_9 = arith.constant 0 : index
    %39 = vector.load %arg3[%c0_8, %c0_9] : memref<1x128xf32, #tpu.memory_space<vmem>>, vector<1x128xf32>
    tpu.vector_store %arg3[%c0_8, %c0_9], %38 {strides = array<i32>} : memref<1x128xf32, #tpu.memory_space<vmem>>, vector<1x128xf32>,
    return
  }
  func.func @transform_0(%arg0: i32) -> i32 {
    %c0_i32 = arith.constant 0 : i32
    %c0_i32_0 = arith.constant 0 : i32
    return %c0_i32 : i32
  }
  func.func @transform_1(%arg0: i32) -> (i32, i32) {
    %c0_i32 = arith.constant 0 : i32
    %c0_i32_0 = arith.constant 0 : i32
    return %arg0, %c0_i32 : i32, i32
  }
  func.func @transform_2(%arg0: i32) -> (i32, i32) {
    %c0_i32 = arith.constant 0 : i32
    %c0_i32_0 = arith.constant 0 : i32
    return %arg0, %c0_i32 : i32, i32
  }
}

</mosaic_0001>

<llo_original>
// kernel: tpu_custom_call.1
$region0: #{tpu_custom_call.1}
  #allocation0 [shape = 'u32[]', space=smem, size = 0x4, offset = 0x4, fixed_abs, tag = 'smem constant byte address 0x4 - core index']
  #allocation1 [shape = 'u32[72,128]{1,0:T(1,128)}', space=vmem, size = 0x9000, scoped, tag = 'internal scratch']
  %s0 = inlined_call_operand.hbm [shape: f32[3], index: 0, kind: input, shape index: {}]
  %s1 = inlined_call_operand.hbm [shape: f32[1,128], index: 1, kind: input, shape index: {}]
  %s2 = inlined_call_operand.hbm [shape: f32[1,128], index: 2, kind: output, shape index: {}]
  %s3 = sld [smem:[#allocation0]]
  $region26: #{tpu_custom_call.1} parent=0
    _
  %s5 = ssub.s32 1, %s3
  %s6 = scalar_select 0, %s5, %s3
  $region1: #{tpu_custom_call.1} parent=0
    #allocation2 [shape = 'u8[512]{0}', space=smem, size = 0x200, scoped, tag = 'input window, operand 0, single buffered']
    #allocation3 [shape = 's32[1]{0}', space=sflag, size = 0x4, scoped, tag = 'scoped memory for tpu_custom_call.1']
    #allocation4 [shape = 's32[1]{0}', space=sflag, size = 0x4, scoped, tag = 'scoped memory for tpu_custom_call.1']
    #allocation5 [shape = 's32[1]{0}', space=sflag, size = 0x4, scoped, tag = 'scoped memory for tpu_custom_call.1']
    #allocation6 [shape = 'u8[512]{0}', space=vmem, size = 0x400, scoped, tag = 'input window, operand 1, single buffered']
    #allocation7 [shape = 'u8[512]{0}', space=vmem, size = 0x400, scoped, tag = 'output window, operand 0, single buffered']
    %7 = vsyncpa [#allocation5], 0
    %8 = vsyncpa [#allocation3], 0
    %9 = vsyncpa [#allocation4], 0
    // Predicated region
    $region2: #{tpu_custom_call.1} parent=1 // pred_check
      _
    $region3: #{tpu_custom_call.1} parent=1 // pred_check_branch
      %11 = sbr.rel (0) target = $region5
    $region4: #{tpu_custom_call.1} parent=1 // pred_region
      %13 = vsyncadd [#allocation5], 0
      %s15 = sshll.u32 %s0, 4
      %s16 = int_to_ptr.hbm [resolvable:$true] %s15
      %18 = dma.hbm_to_smem %s16, 16, [#allocation2], [#allocation5]
    $region5: #{tpu_custom_call.1} parent=1 // pred_fallthru
      _
    // Predicated region
    $region6: #{tpu_custom_call.1} parent=1 // pred_check
      _
    $region7: #{tpu_custom_call.1} parent=1 // pred_check_branch
      %20 = sbr.rel (0) target = $region9
    $region8: #{tpu_custom_call.1} parent=1 // pred_region
      %22 = vsyncadd [#allocation3], 0
      %s24 = sshll.u32 %s1, 4
      %s25 = int_to_ptr.hbm [resolvable:$true] %s24
      %s26 = sshll.u32 [#allocation6], 4
      %s27 = int_to_ptr.vmem [resolvable:$true] %s26
      %29 = dma.hbm_to_vmem [thread:$0]  %s25, 16, %s27, [#allocation3]
    $region9: #{tpu_custom_call.1} parent=1 // pred_fallthru
      _
    // Predicated region
    $region10: #{tpu_custom_call.1} parent=1 // pred_check
      _
    $region11: #{tpu_custom_call.1} parent=1 // pred_check_branch
      %31 = sbr.rel (0) target = $region13
    $region12: #{tpu_custom_call.1} parent=1 // pred_region
      %33 = dma.done [#allocation5], 16
    $region13: #{tpu_custom_call.1} parent=1 // pred_fallthru
      _
    // Predicated region
    $region14: #{tpu_custom_call.1} parent=1 // pred_check
      _
    $region15: #{tpu_custom_call.1} parent=1 // pred_check_branch
      %35 = sbr.rel (0) target = $region17
    $region16: #{tpu_custom_call.1} parent=1 // pred_region
      %37 = dma.done [#allocation3], 16
    $region17: #{tpu_custom_call.1} parent=1 // pred_fallthru
      _
    %38 = sfence
    %v39 = vld [vmem:[#allocation6] sm:$0x1]
    %v40 = vlaneseq
    %v41 = vand.u32 %v40, 127
    %vm42 = vcmp.lt.s32.totalorder %v41, 0
    %v43 = vsub.s32 0, %v41
    %v44 = vsel %vm42, %v43, %v41
    %v45 = vshrl.u32 %v44, 4
    %v46 = vand.u32 %v44, 15
    %v47 = vsub.s32 0, %v46
    %v48 = vsel %vm42, %v47, %v46
    %vm49 = vcmp.ne.s32.totalorder %v48, 0
    %vm50 = vcmp.lt.s32.totalorder %v48, 0
    %vm51 = vmand %vm50, %vm49
    %v52 = vadd.s32 %v48, 16
    %v53 = vsel %vm51, %v52, %v48
    %vm54 = vcmp.eq.s32.totalorder %v53, 0
    %55 = vrot.lane.b32.xlu0 %v39, 1
    %v56 = vpop.permute.xlu0 %55
    %v57 = vsel %vm54, 0.0, %v56
    %vm58 = vcmp.eq.s32.totalorder %v53, 15
    %59 = vrot.lane.b32.xlu0 %v39, 127
    %v60 = vpop.permute.xlu0 %59
    %v61 = vsel %vm58, 0.0, %v60
    %s62 = sld [smem:[#allocation2]]
    %v63 = vstv %s62
    %v64 = vmul.f32 %v63, %v57
    %s65 = sld [smem:[#allocation2 + $0x1]]
    %v66 = vstv %s65
    %v67 = vmul.f32 %v66, %v39
    %v68 = vadd.f32 %v64, %v67
    %s69 = sld [smem:[#allocation2 + $0x2]]
    %v70 = vstv %s69
    %v71 = vmul.f32 %v70, %v61
    %v72 = vadd.f32 %v68, %v71
    %73 = vst [vmem:[#allocation7] sm:$0x1] %v72
    // Predicated region
    $region18: #{tpu_custom_call.1} parent=1 // pred_check
      _
    $region19: #{tpu_custom_call.1} parent=1 // pred_check_branch
      %75 = sbr.rel (0) target = $region21
    $region20: #{tpu_custom_call.1} parent=1 // pred_region
      %77 = vsyncadd [#allocation4], 0
      %s79 = sshll.u32 [#allocation7], 4
      %s80 = int_to_ptr.vmem [resolvable:$true] %s79
      %s81 = sshll.u32 %s2, 4
      %s82 = int_to_ptr.hbm [resolvable:$true] %s81
      %84 = dma.vmem_to_hbm [thread:$0]  %s80, 16, %s82, [#allocation4]
    $region21: #{tpu_custom_call.1} parent=1 // pred_fallthru
      _
    // Predicated region
    $region22: #{tpu_custom_call.1} parent=1 // pred_check
      _
    $region23: #{tpu_custom_call.1} parent=1 // pred_check_branch
      %86 = sbr.rel (0) target = $region25
    $region24: #{tpu_custom_call.1} parent=1 // pred_region
      %88 = dma.done [#allocation4], 16
    $region25: #{tpu_custom_call.1} parent=1 // pred_fallthru
      _
    %89 = vsyncpa [#allocation3], 1
    %90 = vsyncpa [#allocation4], 1
    %91 = vsyncpa [#allocation5], 1

</llo_original>
